<compile_context>
chip_gen: v6e
topology: v6e:2x2x1
jax: 0.10.0
libtpu: 0.0.40
codegen_flags: <defaults>
</compile_context>

<pallas_src>
import functools

import jax
import jax.numpy as jnp
from jax.experimental import pallas as pl
from jax.experimental.pallas import tpu as pltpu


def _mlp_tile(x, w1_ref, b1_ref, w2_ref, b2_ref, w3_ref, b3_ref):
    """relu(relu(relu(x@W1+b1)@W2+b2)@W3+b3) for one (tb, d_in) tile, on the MXU."""
    h = jnp.dot(x, w1_ref[...], preferred_element_type=jnp.float32) + b1_ref[...]
    h = jnp.maximum(h, 0.0)
    h = jnp.dot(h, w2_ref[...], preferred_element_type=jnp.float32) + b2_ref[...]
    h = jnp.maximum(h, 0.0)
    h = jnp.dot(h, w3_ref[...], preferred_element_type=jnp.float32) + b3_ref[...]
    return jnp.maximum(h, 0.0)


def mlp_kernel(x_ref, w1_ref, b1_ref, w2_ref, b2_ref, w3_ref, b3_ref, out_ref):
    x = x_ref[...].astype(jnp.float32)
    out_ref[...] = _mlp_tile(
        x, w1_ref, b1_ref, w2_ref, b2_ref, w3_ref, b3_ref
    ).astype(out_ref.dtype)


def mlp_mse_kernel(x_ref, w1_ref, b1_ref, w2_ref, b2_ref, w3_ref, b3_ref,
                   y_ref, loss_ref, *, inv_n):
    # loss_ref is a (1, 1) f32 scalar in SMEM shared across all batch tiles
    # (constant output block index on the "arbitrary" grid axis).  It holds the
    # running sum of squared errors; the 1/N scaling happens once at the end.
    step = pl.program_id(0)

    @pl.when(step == 0)
    def _():
        loss_ref[0, 0] = jnp.float32(0.0)

    x = x_ref[...].astype(jnp.float32)
    pred = _mlp_tile(x, w1_ref, b1_ref, w2_ref, b2_ref, w3_ref, b3_ref)
    d = pred - y_ref[...].astype(jnp.float32)
    loss_ref[0, 0] += jnp.sum(d * d)

    @pl.when(step == pl.num_programs(0) - 1)
    def _():
        loss_ref[0, 0] = loss_ref[0, 0] * inv_n


def _pick_batch_tile(B, block_b):
    """Largest divisor of B that is <= block_b and a multiple of 8 (sublane
    aligned); falls back to B itself (full-array dim is always legal)."""
    tb = min(block_b, B)
    while tb >= 8:
        if B % tb == 0 and tb % 8 == 0:
            return tb
        tb -= 8
    return B


def regressor_forward(feature, params, labels=None, *, block_b=512):
    """params = (w1, b1, w2, b2, w3, b3) in PyTorch layout (w: (out, in))."""
    w1, b1, w2, b2, w3, b3 = params
    B, d_in = feature.shape
    d_out = w3.shape[0]

    # Pre-transpose weights to (in, out) so the kernel runs x @ W on the MXU.
    # (Done in the wrapper, once per jit trace — constant-folded under jit.)
    w1t = jnp.asarray(w1.T, jnp.float32)
    w2t = jnp.asarray(w2.T, jnp.float32)
    w3t = jnp.asarray(w3.T, jnp.float32)
    b1r = jnp.asarray(b1, jnp.float32).reshape(1, d_in)
    b2r = jnp.asarray(b2, jnp.float32).reshape(1, d_in)
    b3r = jnp.asarray(b3, jnp.float32).reshape(1, d_out)

    tb = _pick_batch_tile(B, block_b)
    grid = (B // tb,)

    # Batch tile streams through the pipeline; weights/biases stay resident
    # (constant block index -> fetched once, no per-step re-DMA).
    common_in_specs = [
        pl.BlockSpec((tb, d_in), lambda i: (i, 0)),
        pl.BlockSpec((d_in, d_in), lambda i: (0, 0)),
        pl.BlockSpec((1, d_in), lambda i: (0, 0)),
        pl.BlockSpec((d_in, d_in), lambda i: (0, 0)),
        pl.BlockSpec((1, d_in), lambda i: (0, 0)),
        pl.BlockSpec((d_in, d_out), lambda i: (0, 0)),
        pl.BlockSpec((1, d_out), lambda i: (0, 0)),
    ]

    if labels is None:
        return pl.pallas_call(
            mlp_kernel,
            out_shape=jax.ShapeDtypeStruct((B, d_out), feature.dtype),
            grid=grid,
            in_specs=common_in_specs,
            out_specs=pl.BlockSpec((tb, d_out), lambda i: (i, 0)),
            compiler_params=pltpu.CompilerParams(
                dimension_semantics=("parallel",)),
        )(feature, w1t, b1r, w2t, b2r, w3t, b3r)

    inv_n = 1.0 / float(B * d_out)  # MSELoss default: mean over all elements
    loss = pl.pallas_call(
        functools.partial(mlp_mse_kernel, inv_n=inv_n),
        out_shape=jax.ShapeDtypeStruct((1, 1), jnp.float32),
        grid=grid,
        in_specs=common_in_specs + [pl.BlockSpec((tb, d_out), lambda i: (i, 0))],
        out_specs=pl.BlockSpec(memory_space=pltpu.MemorySpace.SMEM),
        compiler_params=pltpu.CompilerParams(
            dimension_semantics=("arbitrary",)),  # accumulates into loss_ref
    )(feature, w1t, b1r, w2t, b2r, w3t, b3r, labels)
    return loss[0, 0]


def reference(feature, params, labels=None):
    """Pure-JAX reference mirroring the PyTorch module."""
    w1, b1, w2, b2, w3, b3 = params
    dot = functools.partial(jnp.dot, precision="highest")
    h = jnp.maximum(dot(feature, w1.T) + b1, 0.0)
    h = jnp.maximum(dot(h, w2.T) + b2, 0.0)
    h = jnp.maximum(dot(h, w3.T) + b3, 0.0)
    if labels is None:
        return h
    return jnp.mean((h - labels) ** 2)


if __name__ == "__main__":
    B, D_IN, D_OUT = 16, 32, 8

    key = jax.random.PRNGKey(0)
    ks = jax.random.split(key, 8)
    x = jax.random.normal(ks[0], (B, D_IN), dtype=jnp.float32)
    # PyTorch-layout params: weight (out, in), bias (out,)
    w1 = jax.random.normal(ks[1], (D_IN, D_IN), dtype=jnp.float32) * 0.1
    b1 = jax.random.normal(ks[2], (D_IN,), dtype=jnp.float32) * 0.1
    w2 = jax.random.normal(ks[3], (D_IN, D_IN), dtype=jnp.float32) * 0.1
    b2 = jax.random.normal(ks[4], (D_IN,), dtype=jnp.float32) * 0.1
    w3 = jax.random.normal(ks[5], (D_OUT, D_IN), dtype=jnp.float32) * 0.1
    b3 = jax.random.normal(ks[6], (D_OUT,), dtype=jnp.float32) * 0.1
    labels = jax.random.normal(ks[7], (B, D_OUT), dtype=jnp.float32)

    params = (w1, b1, w2, b2, w3, b3)

    # Jit the wrappers so the weight transposes/reshapes are constant-folded
    # and not re-executed per call.  block_b=8 -> grid=(2,) at this toy size,
    # so the batch pipeline (and the loss accumulation across tiles) is
    # actually exercised.
    fwd_fn = jax.jit(lambda xx: regressor_forward(xx, params, block_b=8))
    loss_fn = jax.jit(lambda xx, yy: regressor_forward(xx, params, yy, block_b=8))

    # Inference path (labels=None): returns features.
    feats = jax.block_until_ready(fwd_fn(x))

    # Training path: returns scalar MSE loss.
    loss = jax.block_until_ready(loss_fn(x, labels))

    ref_feats = reference(x, params)
    ref_loss = reference(x, params, labels)

    assert feats.shape == (B, D_OUT)
    assert jnp.allclose(feats, ref_feats, atol=2e-3, rtol=2e-3), "feature mismatch"
    assert jnp.allclose(loss, ref_loss, atol=2e-3, rtol=2e-3), "loss mismatch"

    print("KERNEL_OK")
</pallas_src>

<mosaic_0001>
module attributes {stable_mosaic.version = 11 : i64} {
  func.func @mlp_kernel(%arg0: i32, %arg1: memref<8x32xf32, #tpu.memory_space<vmem>>, %arg2: memref<32x32xf32, #tpu.memory_space<vmem>>, %arg3: memref<1x32xf32, #tpu.memory_space<vmem>>, %arg4: memref<32x32xf32, #tpu.memory_space<vmem>>, %arg5: memref<1x32xf32, #tpu.memory_space<vmem>>, %arg6: memref<32x8xf32, #tpu.memory_space<vmem>>, %arg7: memref<1x8xf32, #tpu.memory_space<vmem>>, %arg8: memref<8x8xf32, #tpu.memory_space<vmem>>) attributes {dimension_semantics = [#tpu.dimension_semantics<parallel>], iteration_bounds = array<i64: 2>, scalar_prefetch = 0 : i64, scratch_operands = 0 : i64, tpu.core_type = #tpu.core_type<tc>, window_params = [{transform_indices = @transform_0, window_bounds = array<i64: 8, 32>}, {pipeline_mode = #tpu.pipeline_mode<synchronous>, transform_indices = @transform_1, window_bounds = array<i64: 32, 32>}, {pipeline_mode = #tpu.pipeline_mode<synchronous>, transform_indices = @transform_2, window_bounds = array<i64: 1, 32>}, {pipeline_mode = #tpu.pipeline_mode<synchronous>, transform_indices = @transform_3, window_bounds = array<i64: 32, 32>}, {pipeline_mode = #tpu.pipeline_mode<synchronous>, transform_indices = @transform_4, window_bounds = array<i64: 1, 32>}, {pipeline_mode = #tpu.pipeline_mode<synchronous>, transform_indices = @transform_5, window_bounds = array<i64: 32, 8>}, {pipeline_mode = #tpu.pipeline_mode<synchronous>, transform_indices = @transform_6, window_bounds = array<i64: 1, 8>}, {transform_indices = @transform_7, window_bounds = array<i64: 8, 8>}]} {
    %c0 = arith.constant 0 : index
    %c0_0 = arith.constant 0 : index
    %0 = vector.load %arg1[%c0, %c0_0] : memref<8x32xf32, #tpu.memory_space<vmem>>, vector<8x32xf32>
    %c0_1 = arith.constant 0 : index
    %c0_2 = arith.constant 0 : index
    %1 = vector.load %arg2[%c0_1, %c0_2] : memref<32x32xf32, #tpu.memory_space<vmem>>, vector<32x32xf32>
    %cst = arith.constant dense<0.000000e+00> : vector<8x32xf32>
    %2 = tpu.matmul %0, %1, %cst {dimension_numbers = #tpu.dot_dimension_numbers<[1], [0], [0], [1], [0, 0, 1, 1], [], []>} : vector<8x32xf32>, vector<32x32xf32>, vector<8x32xf32> -> vector<8x32xf32>
    %c0_3 = arith.constant 0 : index
    %c0_4 = arith.constant 0 : index
    %3 = vector.load %arg3[%c0_3, %c0_4] : memref<1x32xf32, #tpu.memory_space<vmem>>, vector<1x32xf32>
    %4 = vector.broadcast %3 : vector<1x32xf32> to vector<8x32xf32>
    %5 = arith.addf %2, %4 : vector<8x32xf32>
    %cst_5 = arith.constant 0.000000e+00 : f32
    %6 = vector.broadcast %cst_5 : f32 to vector<8x32xf32>
    %7 = arith.maximumf %5, %6 : vector<8x32xf32>
    %c0_6 = arith.constant 0 : index
    %c0_7 = arith.constant 0 : index
    %8 = vector.load %arg4[%c0_6, %c0_7] : memref<32x32xf32, #tpu.memory_space<vmem>>, vector<32x32xf32>
    %cst_8 = arith.constant dense<0.000000e+00> : vector<8x32xf32>
    %9 = tpu.matmul %7, %8, %cst_8 {dimension_numbers = #tpu.dot_dimension_numbers<[1], [0], [0], [1], [0, 0, 1, 1], [], []>} : vector<8x32xf32>, vector<32x32xf32>, vector<8x32xf32> -> vector<8x32xf32>
    %c0_9 = arith.constant 0 : index
    %c0_10 = arith.constant 0 : index
    %10 = vector.load %arg5[%c0_9, %c0_10] : memref<1x32xf32, #tpu.memory_space<vmem>>, vector<1x32xf32>
    %11 = vector.broadcast %10 : vector<1x32xf32> to vector<8x32xf32>
    %12 = arith.addf %9, %11 : vector<8x32xf32>
    %cst_11 = arith.constant 0.000000e+00 : f32
    %13 = vector.broadcast %cst_11 : f32 to vector<8x32xf32>
    %14 = arith.maximumf %12, %13 : vector<8x32xf32>
    %c0_12 = arith.constant 0 : index
    %c0_13 = arith.constant 0 : index
    %15 = vector.load %arg6[%c0_12, %c0_13] : memref<32x8xf32, #tpu.memory_space<vmem>>, vector<32x8xf32>
    %cst_14 = arith.constant dense<0.000000e+00> : vector<8x8xf32>
    %16 = tpu.matmul %14, %15, %cst_14 {dimension_numbers = #tpu.dot_dimension_numbers<[1], [0], [0], [1], [0, 0, 1, 1], [], []>} : vector<8x32xf32>, vector<32x8xf32>, vector<8x8xf32> -> vector<8x8xf32>
    %c0_15 = arith.constant 0 : index
    %c0_16 = arith.constant 0 : index
    %17 = vector.load %arg7[%c0_15, %c0_16] : memref<1x8xf32, #tpu.memory_space<vmem>>, vector<1x8xf32>
    %18 = vector.broadcast %17 : vector<1x8xf32> to vector<8x8xf32>
    %19 = arith.addf %16, %18 : vector<8x8xf32>
    %cst_17 = arith.constant 0.000000e+00 : f32
    %20 = vector.broadcast %cst_17 : f32 to vector<8x8xf32>
    %21 = arith.maximumf %19, %20 : vector<8x8xf32>
    %c0_18 = arith.constant 0 : index
    %c0_19 = arith.constant 0 : index
    %22 = vector.load %arg8[%c0_18, %c0_19] : memref<8x8xf32, #tpu.memory_space<vmem>>, vector<8x8xf32>
    tpu.vector_store %arg8[%c0_18, %c0_19], %21 {strides = array<i32>} : memref<8x8xf32, #tpu.memory_space<vmem>>, vector<8x8xf32>,
    return
  }
  func.func @transform_0(%arg0: i32) -> (i32, i32) {
    %c0_i32 = arith.constant 0 : i32
    %c0_i32_0 = arith.constant 0 : i32
    return %arg0, %c0_i32 : i32, i32
  }
  func.func @transform_1(%arg0: i32) -> (i32, i32) {
    %c0_i32 = arith.constant 0 : i32
    %c0_i32_0 = arith.constant 0 : i32
    %c0_i32_1 = arith.constant 0 : i32
    return %c0_i32, %c0_i32_0 : i32, i32
  }
  func.func @transform_2(%arg0: i32) -> (i32, i32) {
    %c0_i32 = arith.constant 0 : i32
    %c0_i32_0 = arith.constant 0 : i32
    %c0_i32_1 = arith.constant 0 : i32
    return %c0_i32, %c0_i32_0 : i32, i32
  }
  func.func @transform_3(%arg0: i32) -> (i32, i32) {
    %c0_i32 = arith.constant 0 : i32
    %c0_i32_0 = arith.constant 0 : i32
    %c0_i32_1 = arith.constant 0 : i32
    return %c0_i32, %c0_i32_0 : i32, i32
  }
  func.func @transform_4(%arg0: i32) -> (i32, i32) {
    %c0_i32 = arith.constant 0 : i32
    %c0_i32_0 = arith.constant 0 : i32
    %c0_i32_1 = arith.constant 0 : i32
    return %c0_i32, %c0_i32_0 : i32, i32
  }
  func.func @transform_5(%arg0: i32) -> (i32, i32) {
    %c0_i32 = arith.constant 0 : i32
    %c0_i32_0 = arith.constant 0 : i32
    %c0_i32_1 = arith.constant 0 : i32
    return %c0_i32, %c0_i32_0 : i32, i32
  }
  func.func @transform_6(%arg0: i32) -> (i32, i32) {
    %c0_i32 = arith.constant 0 : i32
    %c0_i32_0 = arith.constant 0 : i32
    %c0_i32_1 = arith.constant 0 : i32
    return %c0_i32, %c0_i32_0 : i32, i32
  }
  func.func @transform_7(%arg0: i32) -> (i32, i32) {
    %c0_i32 = arith.constant 0 : i32
    %c0_i32_0 = arith.constant 0 : i32
    return %arg0, %c0_i32 : i32, i32
  }
}

</mosaic_0001>

<llo_original>
// kernel: _lambda_.1
$region0: #{_lambda_.1}
  #allocation0 [shape = 'u32[]', space=smem, size = 0x4, offset = 0x4, fixed_abs, tag = 'smem constant byte address 0x4 - core index']
  #allocation1 [shape = 'u32[144,128]{1,0:T(1,128)}', space=vmem, size = 0x12000, scoped, tag = 'internal scratch']
  %s0 = inlined_call_operand.hbm [shape: f32[16,32], index: 0, kind: input, shape index: {}]
  %s1 = inlined_call_operand.hbm [shape: f32[32,32], index: 1, kind: input, shape index: {}]
  %s2 = inlined_call_operand.vmem [shape: f32[1,32], index: 2, kind: input, shape index: {}]
  %s3 = inlined_call_operand.hbm [shape: f32[32,32], index: 3, kind: input, shape index: {}]
  %s4 = inlined_call_operand.vmem [shape: f32[1,32], index: 4, kind: input, shape index: {}]
  %s5 = inlined_call_operand.hbm [shape: f32[32,8], index: 5, kind: input, shape index: {}]
  %s6 = inlined_call_operand.vmem [shape: f32[1,8], index: 6, kind: input, shape index: {}]
  %s7 = inlined_call_operand.vmem [shape: f32[16,8], index: 7, kind: output, shape index: {}]
  %s8 = sld [smem:[#allocation0]]
  $region77: #{_lambda_.1} parent=0
    _
  %s10 = ssub.s32 1, %s8
  %s11 = scalar_select 0, %s10, %s8
  $region1: #{_lambda_.1} parent=0
    #allocation2 [shape = 'u8[8192]{0}', space=vmem, size = 0x2000, scoped, tag = 'input window, operand 0']
    #allocation3 [shape = 's32[2]{0}', space=sflag, size = 0x8, scoped, tag = 'scoped memory for _lambda_.1']
    #allocation4 [shape = 'u8[16384]{0}', space=vmem, size = 0x4000, scoped, tag = 'input window, operand 1, single buffered']
    #allocation5 [shape = 's32[1]{0}', space=sflag, size = 0x4, scoped, tag = 'scoped memory for _lambda_.1']
    #allocation6 [shape = 'u8[16384]{0}', space=vmem, size = 0x4000, scoped, tag = 'input window, operand 3, single buffered']
    #allocation7 [shape = 'u8[16384]{0}', space=vmem, size = 0x4000, scoped, tag = 'input window, operand 5, single buffered']
    #allocation8 [shape = 's32[1]{0}', space=sflag, size = 0x4, scoped, tag = 'scoped memory for _lambda_.1']
    %12 = vsyncpa [#allocation3], 0
    %s13 = scalar_lea.sflag [#allocation3], 1
    %14 = vsyncpa %s13, 0
    %15 = vsyncpa [#allocation5], 0
    %16 = vsyncpa [#allocation8], 0
    loop: start=0, step=1, limit=4
    $region2: #{_lambda_.1} parent=1 // loop_pre_header
      _
    $region3: #{_lambda_.1} parent=1 // loop_header
      %s18 = sphi 0, %s22
      %p19 = scmp.ge.s32.totalorder %s18, 4
      %s28 = sphi 0, %s30
      %s31 = sphi 0, %s28
      %s32 = sphi 0, %s31
      %s48 = sphi 0, %s32
      %s52 = sphi 0, %s52
      %s54 = sphi 0, %s52
      %s55 = sphi 0, %s54
      %s69 = sphi 0, %s55
      %s73 = sphi 0, %s73
      %s75 = sphi 0, %s73
      %s76 = sphi 0, %s75
      %s90 = sphi 0, %s76
      %s94 = sphi 0, %s94
      %s96 = sphi 0, %s94
      %s97 = sphi 0, %s96
      %s111 = sphi 0, %s97
      %s115 = sphi 0, %s115
      %s117 = sphi 0, %s115
      %s118 = sphi 0, %s117
      %s132 = sphi 0, %s118
      %s136 = sphi 0, %s136
      %s138 = sphi 0, %s136
      %s139 = sphi 0, %s138
      %s153 = sphi 0, %s139
      %s157 = sphi 0, %s157
      %s159 = sphi 0, %s157
      %s160 = sphi 0, %s159
      %s174 = sphi 0, %s160
      %s180 = sphi 0, %s182
      %s183 = sphi 0, %s180
      %s184 = sphi 0, %s183
      %s200 = sphi 0, %s184
    $region4: #{_lambda_.1} parent=1 // loop_header_branch
      %21 = sbr.rel (%p19) target = $region8
    $region5: #{_lambda_.1} parent=1 // loop_body
      %s23 = ssub.s32 %s18, 1
      %s24 = ssub.s32 %s18, 2
      %s25 = sadd.s32 %s18, 1
      %s26 = ssub.s32 %s18, %s25
      %p27 = scmp.eq.s32.totalorder %s26, 0
      %s29 = sadd.s32 %s28, 1
      %s30 = scalar_select %p27, %s28, %s29
      %p33 = pneg %p27
      %p34 = scmp.eq.s32.totalorder %s18, 1
      %p35 = por %p33, %p34
      %p36 = scmp.ne.s32.totalorder %s28, %s31
      %p37 = scmp.eq.s32.totalorder %s18, 0
      %p38 = por %p36, %p37
      %p39 = scmp.ne.s32.totalorder %s28, %s31
      %p40 = scmp.eq.s32.totalorder %s23, 1
      %p41 = por %p39, %p40
      %p42 = scmp.ne.s32.totalorder %s31, %s32
      %p43 = scmp.eq.s32.totalorder %s23, 0
      %p44 = por %p42, %p43
      %p45 = scmp.ne.s32.totalorder %s31, %s32
      %p46 = scmp.eq.s32.totalorder %s24, 1
      %p47 = por %p45, %p46
      %p49 = scmp.ne.s32.totalorder %s32, %s48
      %p50 = scmp.eq.s32.totalorder %s24, 0
      %p51 = por %p49, %p50
      %s53 = sadd.s32 %s52, 1
      %p56 = scmp.eq.s32.totalorder %s18, 1
      %p57 = scmp.ne.s32.totalorder %s52, %s54
      %p58 = scmp.eq.s32.totalorder %s18, 0
      %p59 = por %p57, %p58
      %p60 = scmp.ne.s32.totalorder %s52, %s54
      %p61 = scmp.eq.s32.totalorder %s23, 1
      %p62 = por %p60, %p61
      %p63 = scmp.ne.s32.totalorder %s54, %s55
      %p64 = scmp.eq.s32.totalorder %s23, 0
      %p65 = por %p63, %p64
      %p66 = scmp.ne.s32.totalorder %s54, %s55
      %p67 = scmp.eq.s32.totalorder %s24, 1
      %p68 = por %p66, %p67
      %p70 = scmp.ne.s32.totalorder %s55, %s69
      %p71 = scmp.eq.s32.totalorder %s24, 0
      %p72 = por %p70, %p71
      %s74 = sadd.s32 %s73, 1
      %p77 = scmp.eq.s32.totalorder %s18, 1
      %p78 = scmp.ne.s32.totalorder %s73, %s75
      %p79 = scmp.eq.s32.totalorder %s18, 0
      %p80 = por %p78, %p79
      %p81 = scmp.ne.s32.totalorder %s73, %s75
      %p82 = scmp.eq.s32.totalorder %s23, 1
      %p83 = por %p81, %p82
      %p84 = scmp.ne.s32.totalorder %s75, %s76
      %p85 = scmp.eq.s32.totalorder %s23, 0
      %p86 = por %p84, %p85
      %p87 = scmp.ne.s32.totalorder %s75, %s76
      %p88 = scmp.eq.s32.totalorder %s24, 1
      %p89 = por %p87, %p88
      %p91 = scmp.ne.s32.totalorder %s76, %s90
      %p92 = scmp.eq.s32.totalorder %s24, 0
      %p93 = por %p91, %p92
      %s95 = sadd.s32 %s94, 1
      %p98 = scmp.eq.s32.totalorder %s18, 1
      %p99 = scmp.ne.s32.totalorder %s94, %s96
      %p100 = scmp.eq.s32.totalorder %s18, 0
      %p101 = por %p99, %p100
      %p102 = scmp.ne.s32.totalorder %s94, %s96
      %p103 = scmp.eq.s32.totalorder %s23, 1
      %p104 = por %p102, %p103
      %p105 = scmp.ne.s32.totalorder %s96, %s97
      %p106 = scmp.eq.s32.totalorder %s23, 0
      %p107 = por %p105, %p106
      %p108 = scmp.ne.s32.totalorder %s96, %s97
      %p109 = scmp.eq.s32.totalorder %s24, 1
      %p110 = por %p108, %p109
      %p112 = scmp.ne.s32.totalorder %s97, %s111
      %p113 = scmp.eq.s32.totalorder %s24, 0
      %p114 = por %p112, %p113
      %s116 = sadd.s32 %s115, 1
      %p119 = scmp.eq.s32.totalorder %s18, 1
      %p120 = scmp.ne.s32.totalorder %s115, %s117
      %p121 = scmp.eq.s32.totalorder %s18, 0
      %p122 = por %p120, %p121
      %p123 = scmp.ne.s32.totalorder %s115, %s117
      %p124 = scmp.eq.s32.totalorder %s23, 1
      %p125 = por %p123, %p124
      %p126 = scmp.ne.s32.totalorder %s117, %s118
      %p127 = scmp.eq.s32.totalorder %s23, 0
      %p128 = por %p126, %p127
      %p129 = scmp.ne.s32.totalorder %s117, %s118
      %p130 = scmp.eq.s32.totalorder %s24, 1
      %p131 = por %p129, %p130
      %p133 = scmp.ne.s32.totalorder %s118, %s132
      %p134 = scmp.eq.s32.totalorder %s24, 0
      %p135 = por %p133, %p134
      %s137 = sadd.s32 %s136, 1
      %p140 = scmp.eq.s32.totalorder %s18, 1
      %p141 = scmp.ne.s32.totalorder %s136, %s138
      %p142 = scmp.eq.s32.totalorder %s18, 0
      %p143 = por %p141, %p142
      %p144 = scmp.ne.s32.totalorder %s136, %s138
      %p145 = scmp.eq.s32.totalorder %s23, 1
      %p146 = por %p144, %p145
      %p147 = scmp.ne.s32.totalorder %s138, %s139
      %p148 = scmp.eq.s32.totalorder %s23, 0
      %p149 = por %p147, %p148
      %p150 = scmp.ne.s32.totalorder %s138, %s139
      %p151 = scmp.eq.s32.totalorder %s24, 1
      %p152 = por %p150, %p151
      %p154 = scmp.ne.s32.totalorder %s139, %s153
      %p155 = scmp.eq.s32.totalorder %s24, 0
      %p156 = por %p154, %p155
      %s158 = sadd.s32 %s157, 1
      %p161 = scmp.eq.s32.totalorder %s18, 1
      %p162 = scmp.ne.s32.totalorder %s157, %s159
      %p163 = scmp.eq.s32.totalorder %s18, 0
      %p164 = por %p162, %p163
      %p165 = scmp.ne.s32.totalorder %s157, %s159
      %p166 = scmp.eq.s32.totalorder %s23, 1
      %p167 = por %p165, %p166
      %p168 = scmp.ne.s32.totalorder %s159, %s160
      %p169 = scmp.eq.s32.totalorder %s23, 0
      %p170 = por %p168, %p169
      %p171 = scmp.ne.s32.totalorder %s159, %s160
      %p172 = scmp.eq.s32.totalorder %s24, 1
      %p173 = por %p171, %p172
      %p175 = scmp.ne.s32.totalorder %s160, %s174
      %p176 = scmp.eq.s32.totalorder %s24, 0
      %p177 = por %p175, %p176
      %s178 = ssub.s32 %s18, %s25
      %p179 = scmp.eq.s32.totalorder %s178, 0
      %s181 = sadd.s32 %s180, 1
      %s182 = scalar_select %p179, %s180, %s181
      %p185 = pneg %p179
      %p186 = scmp.eq.s32.totalorder %s18, 1
      %p187 = por %p185, %p186
      %p188 = scmp.ne.s32.totalorder %s180, %s183
      %p189 = scmp.eq.s32.totalorder %s18, 0
      %p190 = por %p188, %p189
      %p191 = scmp.ne.s32.totalorder %s180, %s183
      %p192 = scmp.eq.s32.totalorder %s23, 1
      %p193 = por %p191, %p192
      %p194 = scmp.ne.s32.totalorder %s183, %s184
      %p195 = scmp.eq.s32.totalorder %s23, 0
      %p196 = por %p194, %p195
      %p197 = scmp.ne.s32.totalorder %s183, %s184
      %p198 = scmp.eq.s32.totalorder %s24, 1
      %p199 = por %p197, %p198
      %p201 = scmp.ne.s32.totalorder %s184, %s200
      %p202 = scmp.eq.s32.totalorder %s24, 0
      %p203 = por %p201, %p202
      %p204 = scmp.le.s32.totalorder 1, %s18
      %p205 = scmp.lt.s32.totalorder %s18, 3
      %p206 = pnand %p204, %p205
      %p207 = pneg %p206
      // Predicated region
      $region9: #{_lambda_.1} parent=5 // pred_check
        _
      $region10: #{_lambda_.1} parent=5 // pred_check_branch
        %209 = sbr.rel (%p206) target = $region12
      $region11: #{_lambda_.1} parent=5 // pred_region
        %s210 = ssub.s32 %s18, 1
        // Predicated region
        $region13: #{_lambda_.1} parent=11 // pred_check
          %p211 = pneg %p65
        $region14: #{_lambda_.1} parent=11 // pred_check_branch
          %213 = sbr.rel (%p211) target = $region16
        $region15: #{_lambda_.1} parent=11 // pred_region
          %s215 = ssub.s32 512, 512
          %216 = vsyncadd [#allocation5], %s215
          %s217 = sshll.u32 [#allocation4], 4
          %s218 = int_to_ptr.vmem [resolvable:$true] %s217
          %223 = dma.hbm_to_vmem [thread:$0]  %s1, 512, %s218, [#allocation5], 128, 128, 8
        $region16: #{_lambda_.1} parent=11 // pred_fallthru
          _
        // Predicated region
        $region17: #{_lambda_.1} parent=11 // pred_check
          %p224 = pneg %p86
        $region18: #{_lambda_.1} parent=11 // pred_check_branch
          %226 = sbr.rel (%p224) target = $region20
        $region19: #{_lambda_.1} parent=11 // pred_region
          _
        $region20: #{_lambda_.1} parent=11 // pred_fallthru
          _
        // Predicated region
        $region21: #{_lambda_.1} parent=11 // pred_check
          %p227 = pneg %p107
        $region22: #{_lambda_.1} parent=11 // pred_check_branch
          %229 = sbr.rel (%p227) target = $region24
        $region23: #{_lambda_.1} parent=11 // pred_region
          %s231 = ssub.s32 512, 512
          %232 = vsyncadd [#allocation5], %s231
          %s233 = sshll.u32 [#allocation6], 4
          %s234 = int_to_ptr.vmem [resolvable:$true] %s233
          %239 = dma.hbm_to_vmem [thread:$0]  %s3, 512, %s234, [#allocation5], 128, 128, 8
        $region24: #{_lambda_.1} parent=11 // pred_fallthru
          _
        // Predicated region
        $region25: #{_lambda_.1} parent=11 // pred_check
          %p240 = pneg %p128
        $region26: #{_lambda_.1} parent=11 // pred_check_branch
          %242 = sbr.rel (%p240) target = $region28
        $region27: #{_lambda_.1} parent=11 // pred_region
          _
        $region28: #{_lambda_.1} parent=11 // pred_fallthru
          _
        // Predicated region
        $region29: #{_lambda_.1} parent=11 // pred_check
          %p243 = pneg %p149
        $region30: #{_lambda_.1} parent=11 // pred_check_branch
          %245 = sbr.rel (%p243) target = $region32
        $region31: #{_lambda_.1} parent=11 // pred_region
          %s247 = ssub.s32 512, 512
          %248 = vsyncadd [#allocation8], %s247
          %s249 = sshll.u32 [#allocation7], 4
          %s250 = int_to_ptr.vmem [resolvable:$true] %s249
          %255 = dma.hbm_to_vmem [thread:$0]  %s5, 512, %s250, [#allocation8], 128, 128, 8
        $region32: #{_lambda_.1} parent=11 // pred_fallthru
          _
        // Predicated region
        $region33: #{_lambda_.1} parent=11 // pred_check
          %p256 = pneg %p170
        $region34: #{_lambda_.1} parent=11 // pred_check_branch
          %258 = sbr.rel (%p256) target = $region36
        $region35: #{_lambda_.1} parent=11 // pred_region
          _
        $region36: #{_lambda_.1} parent=11 // pred_fallthru
          _
      $region12: #{_lambda_.1} parent=5 // pred_fallthru
        _
      %p259 = scmp.lt.s32.totalorder %s18, 2
      // Predicated region
      $region37: #{_lambda_.1} parent=5 // pred_check
        %p260 = pneg %p259
      $region38: #{_lambda_.1} parent=5 // pred_check_branch
        %262 = sbr.rel (%p260) target = $region40
      $region39: #{_lambda_.1} parent=5 // pred_region
        // Predicated region
        $region41: #{_lambda_.1} parent=39 // pred_check
          %p263 = pneg %p38
        $region42: #{_lambda_.1} parent=39 // pred_check_branch
          %265 = sbr.rel (%p263) target = $region44
        $region43: #{_lambda_.1} parent=39 // pred_region
          %s266 = sand.u32 %s28, 1
          %s267 = scalar_lea.sflag [#allocation3], %s266
          %s268 = sand.u32 %s28, 1
          %s269 = smul.addr %s268, 8
          %s270 = scalar_lea.vmem [#allocation2], %s269
          %s272 = ssub.s32 128, 128
          %273 = vsyncadd %s267, %s272
          %s274 = smul.addr %s18, 128
          %s275 = scalar_lea.hbm %s0, %s274
          %s277 = sshll.u32 %s270, 4
          %s278 = int_to_ptr.vmem [resolvable:$true] %s277
          %280 = dma.hbm_to_vmem [thread:$0]  %s275, 128, %s278, %s267
        $region44: #{_lambda_.1} parent=39 // pred_fallthru
          _
      $region40: #{_lambda_.1} parent=5 // pred_fallthru
        _
      %p281 = scmp.le.s32.totalorder 1, %s18
      %p282 = scmp.lt.s32.totalorder %s18, 3
      %p283 = pnand %p281, %p282
      %p284 = pneg %p283
      // Predicated region
      $region45: #{_lambda_.1} parent=5 // pred_check
        _
      $region46: #{_lambda_.1} parent=5 // pred_check_branch
        %286 = sbr.rel (%p283) target = $region48
      $region47: #{_lambda_.1} parent=5 // pred_region
        %s287 = ssub.s32 %s18, 1
        %s288 = sand.u32 %s31, 1
        %s289 = scalar_lea.sflag [#allocation3], %s288
        %s290 = sand.u32 %s31, 1
        %s291 = smul.addr %s290, 8
        %s292 = scalar_lea.vmem [#allocation2], %s291
        // Predicated region
        $region49: #{_lambda_.1} parent=47 // pred_check
          %p293 = pneg %p44
        $region50: #{_lambda_.1} parent=47 // pred_check_branch
          %295 = sbr.rel (%p293) target = $region52
        $region51: #{_lambda_.1} parent=47 // pred_region
          %296 = dma.done %s289, 128
        $region52: #{_lambda_.1} parent=47 // pred_fallthru
          _
        // Predicated region
        $region53: #{_lambda_.1} parent=47 // pred_check
          %p297 = pneg %p65
        $region54: #{_lambda_.1} parent=47 // pred_check_branch
          %299 = sbr.rel (%p297) target = $region56
        $region55: #{_lambda_.1} parent=47 // pred_region
          %300 = dma.done [#allocation5], 512
        $region56: #{_lambda_.1} parent=47 // pred_fallthru
          _
        // Predicated region
        $region57: #{_lambda_.1} parent=47 // pred_check
          %p301 = pneg %p107
        $region58: #{_lambda_.1} parent=47 // pred_check_branch
          %303 = sbr.rel (%p301) target = $region60
        $region59: #{_lambda_.1} parent=47 // pred_region
          %304 = dma.done [#allocation5], 512
        $region60: #{_lambda_.1} parent=47 // pred_fallthru
          _
        // Predicated region
        $region61: #{_lambda_.1} parent=47 // pred_check
          %p305 = pneg %p149
        $region62: #{_lambda_.1} parent=47 // pred_check_branch
          %307 = sbr.rel (%p305) target = $region64
        $region63: #{_lambda_.1} parent=47 // pred_region
          %308 = dma.done [#allocation8], 512
        $region64: #{_lambda_.1} parent=47 // pred_fallthru
          _
        %s309 = sand.u32 %s31, 1
        %s310 = scalar_lea.sflag [#allocation3], %s309
        %s311 = sand.u32 %s31, 1
        %s312 = smul.addr %s311, 8
        %s313 = scalar_lea.vmem [#allocation2], %s312
        %p314 = pneg %p44
        %p315 = pneg %p41
        %p316 = pneg %p65
        %p317 = pneg %p62
        %p318 = pneg %p86
        %p319 = pneg %p83
        %p320 = pneg %p107
        %p321 = pneg %p104
        %p322 = pneg %p128
        %p323 = pneg %p125
        %p324 = pneg %p149
        %p325 = pneg %p146
        %p326 = pneg %p170
        %p327 = pneg %p167
        %p328 = pneg %p196
        %p329 = pneg %p193
        %p330 = scmp.lt.s32.totalorder %s23, 1
        %s331 = scalar_select %p330, %s23, 1
        %s332 = smul.addr %s331, 8
        %s333 = scalar_lea.vmem %s7, %s332
        %p334 = scmp.lt.s32.totalorder %s23, 1
        %s335 = scalar_select %p334, %s23, 1
        %s336 = smul.addr %s335, 8
        %s337 = scalar_lea.vmem %s7, %s336
        %v338 = vld [vmem:[%s292] sm:$0xff]
        %v339 = vld [vmem:[#allocation4] sm:$0xff]
        %v340 = vld [vmem:[#allocation4 + $0x8] sm:$0xff]
        %v341 = vld [vmem:[#allocation4 + $0x10] sm:$0xff]
        %v342 = vld [vmem:[#allocation4 + $0x18] sm:$0xff]
        %v343 = vld [vmem:[%s2] sm:$0x1]
        %v345 = vlaneseq
        %v346 = vshrl.u32 %v345, 7
        %v347 = vsub.s32 0, %v346
        %v348 = vrot.slane %v343, %v347
        %vm350 = vcmask 261120
        %v352 = vsel %vm350, %v338, 0
        %354 = vmatprep.subr.mxu0 0.0
        %355 = vmatpush1.msra.mxu0 0.0
        %356 = vmatprep.subr.mxu0 0.0
        %357 = vmatpush1.msra.mxu0 0.0
        %358 = vmatprep.subr.mxu0 0.0
        %359 = vmatpush1.msra.mxu0 0.0
        %360 = vmatprep.subr.mxu0 0.0
        %361 = vmatpush1.msra.mxu0 0.0
        %362 = vmatprep.subr.mxu0 0.0
        %363 = vmatpush1.msra.mxu0 0.0
        %364 = vmatprep.subr.mxu0 0.0
        %365 = vmatpush1.msra.mxu0 0.0
        %366 = vmatprep.subr.mxu0 0.0
        %367 = vmatpush1.msra.mxu0 0.0
        %368 = vmatprep.subr.mxu0 0.0
        %369 = vmatpush1.msra.mxu0 0.0
        %370 = vmatprep.subr.mxu0 0.0
        %371 = vmatpush1.msra.mxu0 0.0
        %372 = vmatprep.subr.mxu0 0.0
        %373 = vmatpush1.msra.mxu0 0.0
        %374 = vmatprep.subr.mxu0 0.0
        %375 = vmatpush1.msra.mxu0 0.0
        %376 = vmatprep.subr.mxu0 0.0
        %377 = vmatpush1.msra.mxu0 0.0
        %378 = vmatprep.subr.mxu0 0.0
        %379 = vmatpush1.msra.mxu0 %v342
        %380 = vmatprep.subr.mxu0 0.0
        %381 = vmatpush1.msra.mxu0 %v341
        %382 = vmatprep.subr.mxu0 0.0
        %383 = vmatpush1.msra.mxu0 %v340
        %384 = vmatprep.subr.mxu0 0.0
        %385 = vmatpush1.msra.mxu0 %v339
        %386 = vmatprep.subr.mxu0 0.0
        %387 = vmatpush2.msra.mxu0 0.0
        %388 = vmatprep.subr.mxu0 0.0
        %389 = vmatpush2.msra.mxu0 0.0
        %390 = vmatprep.subr.mxu0 0.0
        %391 = vmatpush2.msra.mxu0 0.0
        %392 = vmatprep.subr.mxu0 0.0
        %393 = vmatpush2.msra.mxu0 0.0
        %394 = vmatprep.subr.mxu0 0.0
        %395 = vmatpush2.msra.mxu0 0.0
        %396 = vmatprep.subr.mxu0 0.0
        %397 = vmatpush2.msra.mxu0 0.0
        %398 = vmatprep.subr.mxu0 0.0
        %399 = vmatpush2.msra.mxu0 0.0
        %400 = vmatprep.subr.mxu0 0.0
        %401 = vmatpush2.msra.mxu0 0.0
        %402 = vmatprep.subr.mxu0 0.0
        %403 = vmatpush2.msra.mxu0 0.0
        %404 = vmatprep.subr.mxu0 0.0
        %405 = vmatpush2.msra.mxu0 0.0
        %406 = vmatprep.subr.mxu0 0.0
        %407 = vmatpush2.msra.mxu0 0.0
        %408 = vmatprep.subr.mxu0 0.0
        %409 = vmatpush2.msra.mxu0 0.0
        %410 = vmatprep.subr.mxu0 0.0
        %411 = vmatpush2.msra.mxu0 0.0
        %412 = vmatprep.subr.mxu0 0.0
        %413 = vmatpush2.msra.mxu0 0.0
        %414 = vmatprep.subr.mxu0 0.0
        %415 = vmatpush2.msra.mxu0 0.0
        %416 = vmatprep.subr.mxu0 0.0
        %417 = vmatpush2.msra.mxu0 0.0
        %418 = vmatprep.mubr.f32.mxu0 0.0
        %419 = vmatmul.mubr.f32.gmra.mxu0 %v352
        %v420 = vpop.f32.mrf.mxu0
        %v421 = vadd.f32 %v348, %v420
        %v422 = vpop.f32.mrf.mxu0
        %423 = vdwg.mxu0
        %v424 = vmax.f32 %v421, 0.0
        %v425 = vld [vmem:[#allocation6] sm:$0xff]
        %v426 = vld [vmem:[#allocation6 + $0x8] sm:$0xff]
        %v427 = vld [vmem:[#allocation6 + $0x10] sm:$0xff]
        %v428 = vld [vmem:[#allocation6 + $0x18] sm:$0xff]
        %v429 = vld [vmem:[%s4] sm:$0x1]
        %v431 = vlaneseq
        %v432 = vshrl.u32 %v431, 7
        %v433 = vsub.s32 0, %v432
        %v434 = vrot.slane %v429, %v433
        %v437 = vsel %vm350, %v424, 0
        %439 = vmatprep.subr.mxu0 0.0
        %440 = vmatpush1.msra.mxu0 0.0
        %441 = vmatprep.subr.mxu0 0.0
        %442 = vmatpush1.msra.mxu0 0.0
        %443 = vmatprep.subr.mxu0 0.0
        %444 = vmatpush1.msra.mxu0 0.0
        %445 = vmatprep.subr.mxu0 0.0
        %446 = vmatpush1.msra.mxu0 0.0
        %447 = vmatprep.subr.mxu0 0.0
        %448 = vmatpush1.msra.mxu0 0.0
        %449 = vmatprep.subr.mxu0 0.0
        %450 = vmatpush1.msra.mxu0 0.0
        %451 = vmatprep.subr.mxu0 0.0
        %452 = vmatpush1.msra.mxu0 0.0
        %453 = vmatprep.subr.mxu0 0.0
        %454 = vmatpush1.msra.mxu0 0.0
        %455 = vmatprep.subr.mxu0 0.0
        %456 = vmatpush1.msra.mxu0 0.0
        %457 = vmatprep.subr.mxu0 0.0
        %458 = vmatpush1.msra.mxu0 0.0
        %459 = vmatprep.subr.mxu0 0.0
        %460 = vmatpush1.msra.mxu0 0.0
        %461 = vmatprep.subr.mxu0 0.0
        %462 = vmatpush1.msra.mxu0 0.0
        %463 = vmatprep.subr.mxu0 0.0
        %464 = vmatpush1.msra.mxu0 %v428
        %465 = vmatprep.subr.mxu0 0.0
        %466 = vmatpush1.msra.mxu0 %v427
        %467 = vmatprep.subr.mxu0 0.0
        %468 = vmatpush1.msra.mxu0 %v426
        %469 = vmatprep.subr.mxu0 0.0
        %470 = vmatpush1.msra.mxu0 %v425
        %471 = vmatprep.subr.mxu0 0.0
        %472 = vmatpush2.msra.mxu0 0.0
        %473 = vmatprep.subr.mxu0 0.0
        %474 = vmatpush2.msra.mxu0 0.0
        %475 = vmatprep.subr.mxu0 0.0
        %476 = vmatpush2.msra.mxu0 0.0
        %477 = vmatprep.subr.mxu0 0.0
        %478 = vmatpush2.msra.mxu0 0.0
        %479 = vmatprep.subr.mxu0 0.0
        %480 = vmatpush2.msra.mxu0 0.0
        %481 = vmatprep.subr.mxu0 0.0
        %482 = vmatpush2.msra.mxu0 0.0
        %483 = vmatprep.subr.mxu0 0.0
        %484 = vmatpush2.msra.mxu0 0.0
        %485 = vmatprep.subr.mxu0 0.0
        %486 = vmatpush2.msra.mxu0 0.0
        %487 = vmatprep.subr.mxu0 0.0
        %488 = vmatpush2.msra.mxu0 0.0
        %489 = vmatprep.subr.mxu0 0.0
        %490 = vmatpush2.msra.mxu0 0.0
        %491 = vmatprep.subr.mxu0 0.0
        %492 = vmatpush2.msra.mxu0 0.0
        %493 = vmatprep.subr.mxu0 0.0
        %494 = vmatpush2.msra.mxu0 0.0
        %495 = vmatprep.subr.mxu0 0.0
        %496 = vmatpush2.msra.mxu0 0.0
        %497 = vmatprep.subr.mxu0 0.0
        %498 = vmatpush2.msra.mxu0 0.0
        %499 = vmatprep.subr.mxu0 0.0
        %500 = vmatpush2.msra.mxu0 0.0
        %501 = vmatprep.subr.mxu0 0.0
        %502 = vmatpush2.msra.mxu0 0.0
        %503 = vmatprep.mubr.f32.mxu0 0.0
        %504 = vmatmul.mubr.f32.gmra.mxu0 %v437
        %v505 = vpop.f32.mrf.mxu0
        %v506 = vadd.f32 %v434, %v505
        %v507 = vpop.f32.mrf.mxu0
        %508 = vdwg.mxu0
        %v509 = vmax.f32 %v506, 0.0
        %v510 = vld [vmem:[#allocation7] sm:$0xff]
        %v511 = vld [vmem:[#allocation7 + $0x8] sm:$0xff]
        %v512 = vld [vmem:[#allocation7 + $0x10] sm:$0xff]
        %v513 = vld [vmem:[#allocation7 + $0x18] sm:$0xff]
        %v514 = vld [vmem:[%s6] sm:$0x1]
        %v516 = vlaneseq
        %v517 = vshrl.u32 %v516, 7
        %v518 = vsub.s32 0, %v517
        %v519 = vrot.slane %v514, %v518
        %v522 = vsel %vm350, %v509, 0
        %524 = vmatprep.subr.mxu0 0.0
        %525 = vmatpush1.msra.mxu0 0.0
        %526 = vmatprep.subr.mxu0 0.0
        %527 = vmatpush1.msra.mxu0 0.0
        %528 = vmatprep.subr.mxu0 0.0
        %529 = vmatpush1.msra.mxu0 0.0
        %530 = vmatprep.subr.mxu0 0.0
        %531 = vmatpush1.msra.mxu0 0.0
        %532 = vmatprep.subr.mxu0 0.0
        %533 = vmatpush1.msra.mxu0 0.0
        %534 = vmatprep.subr.mxu0 0.0
        %535 = vmatpush1.msra.mxu0 0.0
        %536 = vmatprep.subr.mxu0 0.0
        %537 = vmatpush1.msra.mxu0 0.0
        %538 = vmatprep.subr.mxu0 0.0
        %539 = vmatpush1.msra.mxu0 0.0
        %540 = vmatprep.subr.mxu0 0.0
        %541 = vmatpush1.msra.mxu0 0.0
        %542 = vmatprep.subr.mxu0 0.0
        %543 = vmatpush1.msra.mxu0 0.0
        %544 = vmatprep.subr.mxu0 0.0
        %545 = vmatpush1.msra.mxu0 0.0
        %546 = vmatprep.subr.mxu0 0.0
        %547 = vmatpush1.msra.mxu0 0.0
        %548 = vmatprep.subr.mxu0 0.0
        %549 = vmatpush1.msra.mxu0 %v513
        %550 = vmatprep.subr.mxu0 0.0
        %551 = vmatpush1.msra.mxu0 %v512
        %552 = vmatprep.subr.mxu0 0.0
        %553 = vmatpush1.msra.mxu0 %v511
        %554 = vmatprep.subr.mxu0 0.0
        %555 = vmatpush1.msra.mxu0 %v510
        %556 = vmatprep.subr.mxu0 0.0
        %557 = vmatpush2.msra.mxu0 0.0
        %558 = vmatprep.subr.mxu0 0.0
        %559 = vmatpush2.msra.mxu0 0.0
        %560 = vmatprep.subr.mxu0 0.0
        %561 = vmatpush2.msra.mxu0 0.0
        %562 = vmatprep.subr.mxu0 0.0
        %563 = vmatpush2.msra.mxu0 0.0
        %564 = vmatprep.subr.mxu0 0.0
        %565 = vmatpush2.msra.mxu0 0.0
        %566 = vmatprep.subr.mxu0 0.0
        %567 = vmatpush2.msra.mxu0 0.0
        %568 = vmatprep.subr.mxu0 0.0
        %569 = vmatpush2.msra.mxu0 0.0
        %570 = vmatprep.subr.mxu0 0.0
        %571 = vmatpush2.msra.mxu0 0.0
        %572 = vmatprep.subr.mxu0 0.0
        %573 = vmatpush2.msra.mxu0 0.0
        %574 = vmatprep.subr.mxu0 0.0
        %575 = vmatpush2.msra.mxu0 0.0
        %576 = vmatprep.subr.mxu0 0.0
        %577 = vmatpush2.msra.mxu0 0.0
        %578 = vmatprep.subr.mxu0 0.0
        %579 = vmatpush2.msra.mxu0 0.0
        %580 = vmatprep.subr.mxu0 0.0
        %581 = vmatpush2.msra.mxu0 0.0
        %582 = vmatprep.subr.mxu0 0.0
        %583 = vmatpush2.msra.mxu0 0.0
        %584 = vmatprep.subr.mxu0 0.0
        %585 = vmatpush2.msra.mxu0 0.0
        %586 = vmatprep.subr.mxu0 0.0
        %587 = vmatpush2.msra.mxu0 0.0
        %588 = vmatprep.mubr.f32.mxu0 0.0
        %589 = vmatmul.mubr.f32.gmra.mxu0 %v522
        %v590 = vpop.f32.mrf.mxu0
        %v591 = vadd.f32 %v519, %v590
        %v592 = vpop.f32.mrf.mxu0
        %593 = vdwg.mxu0
        %v594 = vmax.f32 %v591, 0.0
        %vm595 = vcmask 64512
        %596 = vst.msk [vmem:[%s337] sm:$0xff] %vm595, %v594
        %p597 = scmp.lt.s32.totalorder %s23, 1
        %s598 = scalar_select %p597, %s23, 1
        %s599 = smul.addr %s598, 8
        %s600 = scalar_lea.vmem %s7, %s599
        // Predicated region
        $region65: #{_lambda_.1} parent=47 // pred_check
          %p601 = pneg %p193
        $region66: #{_lambda_.1} parent=47 // pred_check_branch
          %603 = sbr.rel (%p601) target = $region68
        $region67: #{_lambda_.1} parent=47 // pred_region
          _
        $region68: #{_lambda_.1} parent=47 // pred_fallthru
          _
      $region48: #{_lambda_.1} parent=5 // pred_fallthru
        _
      %p604 = scmp.le.s32.totalorder 2, %s18
      // Predicated region
      $region69: #{_lambda_.1} parent=5 // pred_check
        %p605 = pneg %p604
      $region70: #{_lambda_.1} parent=5 // pred_check_branch
        %607 = sbr.rel (%p605) target = $region72
      $region71: #{_lambda_.1} parent=5 // pred_region
        %s608 = ssub.s32 %s18, 2
        // Predicated region
        $region73: #{_lambda_.1} parent=71 // pred_check
          %p609 = pneg %p199
        $region74: #{_lambda_.1} parent=71 // pred_check_branch
          %611 = sbr.rel (%p609) target = $region76
        $region75: #{_lambda_.1} parent=71 // pred_region
          %p612 = scmp.lt.s32.totalorder %s24, 1
          %s613 = scalar_select %p612, %s24, 1
          %s614 = smul.addr %s613, 8
          %s615 = scalar_lea.vmem %s7, %s614
        $region76: #{_lambda_.1} parent=71 // pred_fallthru
          _
      $region72: #{_lambda_.1} parent=5 // pred_fallthru
        _
    $region6: #{_lambda_.1} parent=1 // loop_footer
      %s22 = sadd.s32 1, %s18
    $region7: #{_lambda_.1} parent=1 // loop_footer_branch
      %17 = sbr.rel target = $region3
    $region8: #{_lambda_.1} parent=1 // loop_exit
      _
    %616 = vsyncpa [#allocation3], 1
    %s617 = scalar_lea.sflag [#allocation3], 1
    %618 = vsyncpa %s617, 1
    %619 = vsyncpa [#allocation5], 1
    %620 = vsyncpa [#allocation8], 1

</llo_original>
